<compile_context>
chip_gen: v5e
topology: v5e:2x2
jax: 0.10.0
libtpu: 0.0.40
codegen_flags: <defaults>
</compile_context>

<pallas_src>
import functools

import jax
import jax.numpy as jnp
from jax.experimental import pallas as pl
from jax.experimental.pallas import tpu as pltpu

LN_EPS = 1e-12  # BERT LayerNorm eps


# --------------------------------------------------------------------------
# Helpers
# --------------------------------------------------------------------------

def _pick_tile(dim, target, align):
    """Largest tile <= target that divides `dim` and is a multiple of `align`;
    falls back to the full dim (always legal for BlockSpec)."""
    if dim <= target:
        return dim
    t = (target // align) * align
    while t >= align:
        if dim % t == 0:
            return t
        t -= align
    return dim


def _layernorm(x, gamma, beta):
    """LayerNorm over the last axis, f32 math."""
    mean = jnp.mean(x, axis=-1, keepdims=True)
    var = jnp.mean(jnp.square(x - mean), axis=-1, keepdims=True)
    return (x - mean) * jax.lax.rsqrt(var + LN_EPS) * gamma + beta


# --------------------------------------------------------------------------
# Kernels
# --------------------------------------------------------------------------

def _embed_kernel(word_ref, pt_ref, ent_ref, evt_ref, g_ref, b_ref, o_ref):
    """Fused BERT embedding path for one (batch, seq-tile):
       e1 = LN(word + pos_type); out = LN(e1 + ent + evt + pos_type)."""
    g = g_ref[...]
    beta = b_ref[...]
    pt = pt_ref[...].astype(jnp.float32)
    e1 = _layernorm(word_ref[0].astype(jnp.float32) + pt, g, beta)
    x = e1 + ent_ref[0].astype(jnp.float32) + evt_ref[0].astype(jnp.float32) + pt
    o_ref[0] = _layernorm(x, g, beta).astype(o_ref.dtype)


def _mm_bias_kernel(x_ref, w_ref, b_ref, o_ref, acc_ref, *, activation):
    """Tiled [tm,tk] @ [tk,tn] with f32 accumulator; bias (+GELU) epilogue."""
    @pl.when(pl.program_id(2) == 0)
    def _():
        acc_ref[...] = jnp.zeros_like(acc_ref)

    acc_ref[...] += jnp.dot(x_ref[...], w_ref[...],
                            preferred_element_type=jnp.float32)

    @pl.when(pl.program_id(2) == pl.num_programs(2) - 1)
    def _():
        y = acc_ref[...] + b_ref[...]
        if activation == "gelu":
            # TODO(synk): HF BERT uses exact erf-GELU; tanh approximation used here.
            y = jax.nn.gelu(y, approximate=True)
        o_ref[...] = y.astype(o_ref.dtype)


def _mm_res_ln_kernel(x_ref, w_ref, b_ref, res_ref, g_ref, beta_ref,
                      o_ref, acc_ref):
    """Tiled [tm,tk] @ [tk,N]; epilogue: + bias + residual, then LayerNorm over N."""
    @pl.when(pl.program_id(1) == 0)
    def _():
        acc_ref[...] = jnp.zeros_like(acc_ref)

    acc_ref[...] += jnp.dot(x_ref[...], w_ref[...],
                            preferred_element_type=jnp.float32)

    @pl.when(pl.program_id(1) == pl.num_programs(1) - 1)
    def _():
        y = acc_ref[...] + b_ref[...] + res_ref[...].astype(jnp.float32)
        o_ref[...] = _layernorm(y, g_ref[...], beta_ref[...]).astype(o_ref.dtype)


def _attention_kernel(qkv_ref, mb_ref, o_ref, *, n_heads, hidden, scale):
    """All heads of one batch element. qkv block is [1, S, 3H]; head split is an
    in-kernel column slice (no XLA transposes). Softmax stats in f32; the divide
    is deferred to the [S, hd] result and uses the EUP reciprocal."""
    qkv = qkv_ref[0]                 # [S, 3H] bf16
    mb = mb_ref[0]                   # [1, S]  f32 additive mask
    hd = hidden // n_heads
    outs = []
    for h in range(n_heads):
        qh = qkv[:, h * hd:(h + 1) * hd]
        kh = qkv[:, hidden + h * hd: hidden + (h + 1) * hd]
        vh = qkv[:, 2 * hidden + h * hd: 2 * hidden + (h + 1) * hd]
        s = jax.lax.dot_general(qh, kh, (((1,), (1,)), ((), ())),
                                preferred_element_type=jnp.float32) * scale
        s = s + mb                                        # broadcast over query rows
        m = jnp.max(s, axis=-1, keepdims=True)
        p = jnp.exp(s - m)
        l = jnp.sum(p, axis=-1, keepdims=True)
        ctx = jnp.dot(p.astype(jnp.bfloat16), vh,
                      preferred_element_type=jnp.float32)  # [S, hd]
        ctx = ctx * pl.reciprocal(l, approx=True)
        outs.append(ctx)
    o_ref[0] = jnp.concatenate(outs, axis=-1).astype(o_ref.dtype)


def _span_pool_kernel(es_ref, ee_ref, ts_ref, te_ref, h_ref, ent_ref, trg_ref):
    """Masked span means for both entity and trigger spans of one batch row,
    reading the hidden state once."""
    b = pl.program_id(0)
    hv = h_ref[0].astype(jnp.float32)                           # [S2, H]
    idx = jax.lax.broadcasted_iota(jnp.int32, hv.shape, 0)      # row indices

    def pool(s, e):
        mask = jnp.logical_and(idx >= s, idx < e).astype(jnp.float32)
        total = jnp.sum(hv * mask, axis=0, keepdims=True)       # [1, H]
        cnt = jnp.maximum((e - s).astype(jnp.float32), 1.0)     # empty-span guard
        return total / cnt

    ent_ref[0] = pool(es_ref[b], ee_ref[b])
    trg_ref[0] = pool(ts_ref[b], te_ref[b])


# --------------------------------------------------------------------------
# Pallas-call wrappers
# --------------------------------------------------------------------------

def embed_sum_layernorm(word, pos_type, ent, evt, gamma, beta):
    """word/ent/evt: [B,S,H] bf16; pos_type: [S,H] bf16 -> [B,S,H] bf16."""
    B, S, H = word.shape
    ts = _pick_tile(S, 256, 8)
    return pl.pallas_call(
        _embed_kernel,
        out_shape=jax.ShapeDtypeStruct((B, S, H), jnp.bfloat16),
        grid=(B, S // ts),
        in_specs=[
            pl.BlockSpec((1, ts, H), lambda b, s: (b, s, 0)),
            pl.BlockSpec((ts, H), lambda b, s: (s, 0)),
            pl.BlockSpec((1, ts, H), lambda b, s: (b, s, 0)),
            pl.BlockSpec((1, ts, H), lambda b, s: (b, s, 0)),
            pl.BlockSpec((1, H), lambda b, s: (0, 0)),
            pl.BlockSpec((1, H), lambda b, s: (0, 0)),
        ],
        out_specs=pl.BlockSpec((1, ts, H), lambda b, s: (b, s, 0)),
        compiler_params=pltpu.CompilerParams(
            dimension_semantics=("parallel", "parallel")),
    )(word, pos_type, ent, evt, gamma.reshape(1, H), beta.reshape(1, H))


def matmul_bias(x, w, b, activation=None, tm=256, tn=256, tk=512):
    """bf16 x[M,K] @ bf16 w[K,N] + b, optional GELU -> bf16 [M,N]."""
    M, K = x.shape
    N = w.shape[1]
    tm = _pick_tile(M, tm, 8)
    tn = _pick_tile(N, tn, 128)
    tk = _pick_tile(K, tk, 128)
    kern = functools.partial(_mm_bias_kernel, activation=activation)
    return pl.pallas_call(
        kern,
        out_shape=jax.ShapeDtypeStruct((M, N), jnp.bfloat16),
        grid=(M // tm, N // tn, K // tk),
        in_specs=[
            pl.BlockSpec((tm, tk), lambda i, j, k: (i, k)),
            pl.BlockSpec((tk, tn), lambda i, j, k: (k, j)),
            pl.BlockSpec((1, tn), lambda i, j, k: (0, j)),
        ],
        out_specs=pl.BlockSpec((tm, tn), lambda i, j, k: (i, j)),
        scratch_shapes=[pltpu.VMEM((tm, tn), jnp.float32)],
        compiler_params=pltpu.CompilerParams(
            dimension_semantics=("parallel", "parallel", "arbitrary")),
    )(x, w, b.reshape(1, N))


def matmul_bias_res_ln(x, w, b, residual, gamma, beta, tm=256, tk=512):
    """bf16 x[M,K] @ bf16 w[K,N] + b + residual, then LayerNorm over N (full-width)."""
    M, K = x.shape
    N = w.shape[1]
    tm = _pick_tile(M, tm, 8)
    tk = _pick_tile(K, tk, 128)
    return pl.pallas_call(
        _mm_res_ln_kernel,
        out_shape=jax.ShapeDtypeStruct((M, N), jnp.bfloat16),
        grid=(M // tm, K // tk),
        in_specs=[
            pl.BlockSpec((tm, tk), lambda i, k: (i, k)),
            pl.BlockSpec((tk, N), lambda i, k: (k, 0)),
            pl.BlockSpec((1, N), lambda i, k: (0, 0)),
            pl.BlockSpec((tm, N), lambda i, k: (i, 0)),
            pl.BlockSpec((1, N), lambda i, k: (0, 0)),
            pl.BlockSpec((1, N), lambda i, k: (0, 0)),
        ],
        out_specs=pl.BlockSpec((tm, N), lambda i, k: (i, 0)),
        scratch_shapes=[pltpu.VMEM((tm, N), jnp.float32)],
        compiler_params=pltpu.CompilerParams(
            dimension_semantics=("parallel", "arbitrary")),
    )(x, w, b.reshape(1, N), residual, gamma.reshape(1, N), beta.reshape(1, N))


def multi_head_attention(qkv, mask_bias, n_heads):
    """qkv: [B, S, 3H] bf16 (fused projections); mask_bias: [B, 1, S] f32."""
    B, S, H3 = qkv.shape
    H = H3 // 3
    hd = H // n_heads
    scale = 1.0 / float(hd) ** 0.5
    kern = functools.partial(_attention_kernel, n_heads=n_heads, hidden=H,
                             scale=scale)
    return pl.pallas_call(
        kern,
        out_shape=jax.ShapeDtypeStruct((B, S, H), jnp.bfloat16),
        grid=(B,),
        in_specs=[
            pl.BlockSpec((1, S, H3), lambda b: (b, 0, 0)),
            pl.BlockSpec((1, 1, S), lambda b: (b, 0, 0)),
        ],
        out_specs=pl.BlockSpec((1, S, H), lambda b: (b, 0, 0)),
        compiler_params=pltpu.CompilerParams(dimension_semantics=("parallel",)),
    )(qkv, mask_bias)


def span_pool_both(h, e_start, e_end, t_start, t_end):
    """h: [B, S2, H] bf16; starts/ends: [B] int32 -> two [B, H] f32 span means."""
    B, S2, H = h.shape
    ent, trg = pl.pallas_call(
        _span_pool_kernel,
        out_shape=(jax.ShapeDtypeStruct((B, 1, H), jnp.float32),
                   jax.ShapeDtypeStruct((B, 1, H), jnp.float32)),
        grid=(B,),
        in_specs=[
            pl.BlockSpec(memory_space=pltpu.MemorySpace.SMEM),
            pl.BlockSpec(memory_space=pltpu.MemorySpace.SMEM),
            pl.BlockSpec(memory_space=pltpu.MemorySpace.SMEM),
            pl.BlockSpec(memory_space=pltpu.MemorySpace.SMEM),
            pl.BlockSpec((1, S2, H), lambda b: (b, 0, 0)),
        ],
        out_specs=(pl.BlockSpec((1, 1, H), lambda b: (b, 0, 0)),
                   pl.BlockSpec((1, 1, H), lambda b: (b, 0, 0))),
        compiler_params=pltpu.CompilerParams(dimension_semantics=("parallel",)),
    )(e_start, e_end, t_start, t_end, h)
    return ent.reshape(B, H), trg.reshape(B, H)


# --------------------------------------------------------------------------
# Parameter init (deterministic, synthetic — no checkpoint loading)
# --------------------------------------------------------------------------

def init_params(key, *, vocab, entity_vocab, event_vocab, hidden, n_layers,
                n_heads, intermediate, max_pos, type_vocab=2):
    def nrm(k, shape, scale=0.02):
        # Weights stored in bf16 (MXU-native, halves HBM traffic); LN/bias in f32.
        return (scale * jax.random.normal(k, shape, dtype=jnp.float32)
                ).astype(jnp.bfloat16)

    keys = jax.random.split(key, 8 + n_layers)
    params = {
        "n_heads": n_heads,
        "hidden": hidden,
        "word_emb": nrm(keys[0], (vocab, hidden)),
        "pos_emb": nrm(keys[1], (max_pos, hidden)),
        "type_emb": nrm(keys[2], (type_vocab, hidden)),
        "entity_emb": nrm(keys[3], (entity_vocab, hidden)),
        "event_emb": nrm(keys[4], (event_vocab, hidden)),
        "emb_ln_g": jnp.ones((hidden,), jnp.float32),
        "emb_ln_b": jnp.zeros((hidden,), jnp.float32),
        "layers": [],
    }
    for l in range(n_layers):
        ks = jax.random.split(keys[8 + l], 6)
        wq = nrm(ks[0], (hidden, hidden))
        wk = nrm(ks[1], (hidden, hidden))
        wv = nrm(ks[2], (hidden, hidden))
        params["layers"].append({
            # fused QKV projection
            "w_qkv": jnp.concatenate([wq, wk, wv], axis=1),
            "b_qkv": jnp.zeros((3 * hidden,), jnp.float32),
            "wo": nrm(ks[3], (hidden, hidden)),
            "bo": jnp.zeros((hidden,), jnp.float32),
            "attn_ln_g": jnp.ones((hidden,), jnp.float32),
            "attn_ln_b": jnp.zeros((hidden,), jnp.float32),
            "w1": nrm(ks[4], (hidden, intermediate)),
            "b1": jnp.zeros((intermediate,), jnp.float32),
            "w2": nrm(ks[5], (intermediate, hidden)),
            "b2": jnp.zeros((hidden,), jnp.float32),
            "ffn_ln_g": jnp.ones((hidden,), jnp.float32),
            "ffn_ln_b": jnp.zeros((hidden,), jnp.float32),
        })
    return params


# --------------------------------------------------------------------------
# Forward pass (mirrors Encoder.forward)
# --------------------------------------------------------------------------

def encoder_forward(params, text_id, entity_id, event_id,
                    entity_start, entity_end, trigger_start, trigger_end,
                    is_train=False):
    # TODO(synk): dropout (the only effect of is_train in the reference) is omitted.
    del is_train
    B, S = text_id.shape
    H = params["hidden"]
    nh = params["n_heads"]

    bert_mask = (text_id > 0).astype(jnp.float32)                      # [B, S]
    mask_bias = ((1.0 - bert_mask) * -1e9).reshape(B, 1, S)            # additive, f32

    # TODO(synk): embedding gathers stay in XLA (no clean static-BlockSpec gather).
    word = params["word_emb"][text_id]                                  # [B,S,H] bf16
    pos_type = (params["pos_emb"][:S].astype(jnp.float32)
                + params["type_emb"][0].astype(jnp.float32)
                ).astype(jnp.bfloat16)                                  # [S,H]
    ent = params["entity_emb"][entity_id]                               # [B,S,H]
    evt = params["event_emb"][event_id]                                 # [B,S,H]

    # (1)+(2): BertEmbeddings(input_ids) -> +entity/event -> re-applied
    #          BertEmbeddings(inputs_embeds), fused into one tiled kernel.
    x = embed_sum_layernorm(word, pos_type, ent, evt,
                            params["emb_ln_g"], params["emb_ln_b"])     # [B,S,H] bf16
    x = x.reshape(B * S, H)

    for layer in params["layers"]:
        qkv = matmul_bias(x, layer["w_qkv"], layer["b_qkv"])            # [M, 3H]
        ctx = multi_head_attention(qkv.reshape(B, S, 3 * H), mask_bias, nh)
        x = matmul_bias_res_ln(ctx.reshape(B * S, H), layer["wo"], layer["bo"],
                               x, layer["attn_ln_g"], layer["attn_ln_b"])
        ffn = matmul_bias(x, layer["w1"], layer["b1"], activation="gelu")
        x = matmul_bias_res_ln(ffn, layer["w2"], layer["b2"],
                               x, layer["ffn_ln_g"], layer["ffn_ln_b"])

    last_hidden = x.reshape(B, S, H)
    h = last_hidden[:, 1:-1, :]                                         # drop [CLS]/[SEP]

    entity_encoding, trigger_encoding = span_pool_both(
        h, entity_start, entity_end, trigger_start, trigger_end)
    return entity_encoding, trigger_encoding


# --------------------------------------------------------------------------
# Demo
# --------------------------------------------------------------------------

if __name__ == "__main__":
    B, S, H, NH, I, L = 2, 16, 64, 2, 128, 2
    VOCAB, ENT_V, EVT_V, MAXPOS = 50, 12, 9, 64

    key = jax.random.PRNGKey(0)
    kp, kd = jax.random.split(key)
    params = init_params(kp, vocab=VOCAB, entity_vocab=ENT_V, event_vocab=EVT_V,
                         hidden=H, n_layers=L, n_heads=NH, intermediate=I,
                         max_pos=MAXPOS)

    k1, k2, k3 = jax.random.split(kd, 3)
    text_id = jax.random.randint(k1, (B, S), 1, VOCAB)
    text_id = text_id.at[1, -2:].set(0)          # padding tokens (id 0 -> masked)
    entity_id = jax.random.randint(k2, (B, S), 0, ENT_V)
    event_id = jax.random.randint(k3, (B, S), 0, EVT_V)

    entity_start = jnp.array([1, 3], dtype=jnp.int32)
    entity_end = jnp.array([4, 7], dtype=jnp.int32)
    trigger_start = jnp.array([0, 5], dtype=jnp.int32)
    trigger_end = jnp.array([2, 9], dtype=jnp.int32)

    ent_enc, trg_enc = encoder_forward(
        params, text_id, entity_id, event_id,
        entity_start, entity_end, trigger_start, trigger_end, is_train=False)

    jax.block_until_ready((ent_enc, trg_enc))
    assert ent_enc.shape == (B, H) and trg_enc.shape == (B, H)
    assert bool(jnp.all(jnp.isfinite(ent_enc))) and bool(jnp.all(jnp.isfinite(trg_enc)))
    print("KERNEL_OK")
</pallas_src>

<mosaic_0001>
module attributes {stable_mosaic.version = 11 : i64} {
  func.func @_embed_kernel(%arg0: i32, %arg1: i32, %arg2: memref<1x16x64xbf16, #tpu.memory_space<vmem>>, %arg3: memref<16x64xbf16, #tpu.memory_space<vmem>>, %arg4: memref<1x16x64xbf16, #tpu.memory_space<vmem>>, %arg5: memref<1x16x64xbf16, #tpu.memory_space<vmem>>, %arg6: memref<1x64xf32, #tpu.memory_space<vmem>>, %arg7: memref<1x64xf32, #tpu.memory_space<vmem>>, %arg8: memref<1x16x64xbf16, #tpu.memory_space<vmem>>) attributes {dimension_semantics = [#tpu.dimension_semantics<parallel>, #tpu.dimension_semantics<parallel>], iteration_bounds = array<i64: 2, 1>, scalar_prefetch = 0 : i64, scratch_operands = 0 : i64, tpu.core_type = #tpu.core_type<tc>, window_params = [{transform_indices = @transform_0, window_bounds = array<i64: 1, 16, 64>}, {transform_indices = @transform_1, window_bounds = array<i64: 16, 64>}, {transform_indices = @transform_2, window_bounds = array<i64: 1, 16, 64>}, {transform_indices = @transform_3, window_bounds = array<i64: 1, 16, 64>}, {pipeline_mode = #tpu.pipeline_mode<synchronous>, transform_indices = @transform_4, window_bounds = array<i64: 1, 64>}, {pipeline_mode = #tpu.pipeline_mode<synchronous>, transform_indices = @transform_5, window_bounds = array<i64: 1, 64>}, {transform_indices = @transform_6, window_bounds = array<i64: 1, 16, 64>}]} {
    %c0 = arith.constant 0 : index
    %c0_0 = arith.constant 0 : index
    %0 = vector.load %arg6[%c0, %c0_0] : memref<1x64xf32, #tpu.memory_space<vmem>>, vector<1x64xf32>
    %c0_1 = arith.constant 0 : index
    %c0_2 = arith.constant 0 : index
    %1 = vector.load %arg7[%c0_1, %c0_2] : memref<1x64xf32, #tpu.memory_space<vmem>>, vector<1x64xf32>
    %c0_3 = arith.constant 0 : index
    %c0_4 = arith.constant 0 : index
    %2 = vector.load %arg3[%c0_3, %c0_4] : memref<16x64xbf16, #tpu.memory_space<vmem>>, vector<16x64xbf16>
    %3 = arith.extf %2 : vector<16x64xbf16> to vector<16x64xf32>
    %c0_5 = arith.constant 0 : index
    %c0_6 = arith.constant 0 : index
    %c0_7 = arith.constant 0 : index
    %4 = vector.load %arg2[%c0_5, %c0_6, %c0_7] : memref<1x16x64xbf16, #tpu.memory_space<vmem>>, vector<1x16x64xbf16>
    %5 = vector.shape_cast %4 : vector<1x16x64xbf16> to vector<16x64xbf16>
    %6 = arith.extf %5 : vector<16x64xbf16> to vector<16x64xf32>
    %7 = arith.addf %6, %3 : vector<16x64xf32>
    %cst = arith.constant dense<0.000000e+00> : vector<16xf32>
    %8 = vector.multi_reduction <add>, %7, %cst [1] : vector<16x64xf32> to vector<16xf32>
    %9 = vector.shape_cast %8 : vector<16xf32> to vector<16x1xf32>
    %cst_8 = arith.constant 6.400000e+01 : f32
    %10 = vector.broadcast %cst_8 : f32 to vector<16x1xf32>
    %11 = arith.divf %9, %10 : vector<16x1xf32>
    %12 = vector.broadcast %11 : vector<16x1xf32> to vector<16x64xf32>
    %13 = arith.subf %7, %12 : vector<16x64xf32>
    %14 = arith.mulf %13, %13 : vector<16x64xf32>
    %cst_9 = arith.constant dense<0.000000e+00> : vector<16xf32>
    %15 = vector.multi_reduction <add>, %14, %cst_9 [1] : vector<16x64xf32> to vector<16xf32>
    %16 = vector.shape_cast %15 : vector<16xf32> to vector<16x1xf32>
    %cst_10 = arith.constant 6.400000e+01 : f32
    %17 = vector.broadcast %cst_10 : f32 to vector<16x1xf32>
    %18 = arith.divf %16, %17 : vector<16x1xf32>
    %19 = vector.broadcast %11 : vector<16x1xf32> to vector<16x64xf32>
    %20 = arith.subf %7, %19 : vector<16x64xf32>
    %cst_11 = arith.constant 9.99999996E-13 : f32
    %21 = vector.broadcast %cst_11 : f32 to vector<16x1xf32>
    %22 = arith.addf %18, %21 : vector<16x1xf32>
    %23 = math.rsqrt %22 : vector<16x1xf32>
    %24 = vector.broadcast %23 : vector<16x1xf32> to vector<16x64xf32>
    %25 = arith.mulf %20, %24 : vector<16x64xf32>
    %26 = vector.broadcast %0 : vector<1x64xf32> to vector<16x64xf32>
    %27 = arith.mulf %25, %26 : vector<16x64xf32>
    %28 = vector.broadcast %1 : vector<1x64xf32> to vector<16x64xf32>
    %29 = arith.addf %27, %28 : vector<16x64xf32>
    %c0_12 = arith.constant 0 : index
    %c0_13 = arith.constant 0 : index
    %c0_14 = arith.constant 0 : index
    %30 = vector.load %arg4[%c0_12, %c0_13, %c0_14] : memref<1x16x64xbf16, #tpu.memory_space<vmem>>, vector<1x16x64xbf16>
    %31 = vector.shape_cast %30 : vector<1x16x64xbf16> to vector<16x64xbf16>
    %32 = arith.extf %31 : vector<16x64xbf16> to vector<16x64xf32>
    %33 = arith.addf %29, %32 : vector<16x64xf32>
    %c0_15 = arith.constant 0 : index
    %c0_16 = arith.constant 0 : index
    %c0_17 = arith.constant 0 : index
    %34 = vector.load %arg5[%c0_15, %c0_16, %c0_17] : memref<1x16x64xbf16, #tpu.memory_space<vmem>>, vector<1x16x64xbf16>
    %35 = vector.shape_cast %34 : vector<1x16x64xbf16> to vector<16x64xbf16>
    %36 = arith.extf %35 : vector<16x64xbf16> to vector<16x64xf32>
    %37 = arith.addf %33, %36 : vector<16x64xf32>
    %38 = arith.addf %37, %3 : vector<16x64xf32>
    %cst_18 = arith.constant dense<0.000000e+00> : vector<16xf32>
    %39 = vector.multi_reduction <add>, %38, %cst_18 [1] : vector<16x64xf32> to vector<16xf32>
    %40 = vector.shape_cast %39 : vector<16xf32> to vector<16x1xf32>
    %cst_19 = arith.constant 6.400000e+01 : f32
    %41 = vector.broadcast %cst_19 : f32 to vector<16x1xf32>
    %42 = arith.divf %40, %41 : vector<16x1xf32>
    %43 = vector.broadcast %42 : vector<16x1xf32> to vector<16x64xf32>
    %44 = arith.subf %38, %43 : vector<16x64xf32>
    %45 = arith.mulf %44, %44 : vector<16x64xf32>
    %cst_20 = arith.constant dense<0.000000e+00> : vector<16xf32>
    %46 = vector.multi_reduction <add>, %45, %cst_20 [1] : vector<16x64xf32> to vector<16xf32>
    %47 = vector.shape_cast %46 : vector<16xf32> to vector<16x1xf32>
    %cst_21 = arith.constant 6.400000e+01 : f32
    %48 = vector.broadcast %cst_21 : f32 to vector<16x1xf32>
    %49 = arith.divf %47, %48 : vector<16x1xf32>
    %50 = vector.broadcast %42 : vector<16x1xf32> to vector<16x64xf32>
    %51 = arith.subf %38, %50 : vector<16x64xf32>
    %cst_22 = arith.constant 9.99999996E-13 : f32
    %52 = vector.broadcast %cst_22 : f32 to vector<16x1xf32>
    %53 = arith.addf %49, %52 : vector<16x1xf32>
    %54 = math.rsqrt %53 : vector<16x1xf32>
    %55 = vector.broadcast %54 : vector<16x1xf32> to vector<16x64xf32>
    %56 = arith.mulf %51, %55 : vector<16x64xf32>
    %57 = vector.broadcast %0 : vector<1x64xf32> to vector<16x64xf32>
    %58 = arith.mulf %56, %57 : vector<16x64xf32>
    %59 = vector.broadcast %1 : vector<1x64xf32> to vector<16x64xf32>
    %60 = arith.addf %58, %59 : vector<16x64xf32>
    %61 = arith.truncf %60 : vector<16x64xf32> to vector<16x64xbf16>
    %c0_23 = arith.constant 0 : index
    %c0_24 = arith.constant 0 : index
    %c0_25 = arith.constant 0 : index
    %62 = vector.load %arg8[%c0_23, %c0_24, %c0_25] : memref<1x16x64xbf16, #tpu.memory_space<vmem>>, vector<1x16x64xbf16>
    %63 = vector.shape_cast %62 : vector<1x16x64xbf16> to vector<16x64xbf16>
    %64 = vector.shape_cast %61 : vector<16x64xbf16> to vector<1x16x64xbf16>
    tpu.vector_store %arg8[%c0_23, %c0_24, %c0_25], %64 {strides = array<i32>} : memref<1x16x64xbf16, #tpu.memory_space<vmem>>, vector<1x16x64xbf16>,
    return
  }
  func.func @transform_0(%arg0: i32, %arg1: i32) -> (i32, i32, i32) {
    %c0_i32 = arith.constant 0 : i32
    %c0_i32_0 = arith.constant 0 : i32
    return %arg0, %arg1, %c0_i32 : i32, i32, i32
  }
  func.func @transform_1(%arg0: i32, %arg1: i32) -> (i32, i32) {
    %c0_i32 = arith.constant 0 : i32
    %c0_i32_0 = arith.constant 0 : i32
    return %arg1, %c0_i32 : i32, i32
  }
  func.func @transform_2(%arg0: i32, %arg1: i32) -> (i32, i32, i32) {
    %c0_i32 = arith.constant 0 : i32
    %c0_i32_0 = arith.constant 0 : i32
    return %arg0, %arg1, %c0_i32 : i32, i32, i32
  }
  func.func @transform_3(%arg0: i32, %arg1: i32) -> (i32, i32, i32) {
    %c0_i32 = arith.constant 0 : i32
    %c0_i32_0 = arith.constant 0 : i32
    return %arg0, %arg1, %c0_i32 : i32, i32, i32
  }
  func.func @transform_4(%arg0: i32, %arg1: i32) -> (i32, i32) {
    %c0_i32 = arith.constant 0 : i32
    %c0_i32_0 = arith.constant 0 : i32
    %c0_i32_1 = arith.constant 0 : i32
    return %c0_i32, %c0_i32_0 : i32, i32
  }
  func.func @transform_5(%arg0: i32, %arg1: i32) -> (i32, i32) {
    %c0_i32 = arith.constant 0 : i32
    %c0_i32_0 = arith.constant 0 : i32
    %c0_i32_1 = arith.constant 0 : i32
    return %c0_i32, %c0_i32_0 : i32, i32
  }
  func.func @transform_6(%arg0: i32, %arg1: i32) -> (i32, i32, i32) {
    %c0_i32 = arith.constant 0 : i32
    %c0_i32_0 = arith.constant 0 : i32
    return %arg0, %arg1, %c0_i32 : i32, i32, i32
  }
}

</mosaic_0001>

<llo_original>
// kernel: tpu_custom_call.1
$region0: #{tpu_custom_call.1}
  #allocation0 [shape = 'u32[]', space=smem, size = 0x4, offset = 0x4, fixed_abs, tag = 'smem constant byte address 0x4 - core index']
  #allocation1 [shape = 'u32[72,128]{1,0:T(1,128)}', space=vmem, size = 0x9000, scoped, tag = 'internal scratch']
  %s0 = inlined_call_operand.hbm [shape: bf16[2,16,64], index: 0, kind: input, shape index: {}]
  %s1 = inlined_call_operand.hbm [shape: bf16[16,64], index: 1, kind: input, shape index: {}]
  %s2 = inlined_call_operand.hbm [shape: bf16[2,16,64], index: 2, kind: input, shape index: {}]
  %s3 = inlined_call_operand.hbm [shape: bf16[2,16,64], index: 3, kind: input, shape index: {}]
  %s4 = inlined_call_operand.vmem [shape: f32[1,64], index: 4, kind: input, shape index: {}]
  %s5 = inlined_call_operand.vmem [shape: f32[1,64], index: 5, kind: input, shape index: {}]
  %s6 = inlined_call_operand.hbm [shape: bf16[2,16,64], index: 6, kind: output, shape index: {}]
  %s7 = sld [smem:[#allocation0]]
  $region73: #{tpu_custom_call.1} parent=0
    _
  %s9 = ssub.s32 1, %s7
  %s10 = scalar_select 0, %s9, %s7
  $region1: #{tpu_custom_call.1} parent=0
    #allocation2 [shape = 'u8[8192]{0}', space=vmem, size = 0x2000, scoped, tag = 'input window, operand 0']
    #allocation3 [shape = 's32[2]{0}', space=sflag, size = 0x8, scoped, tag = 'scoped memory for tpu_custom_call.1']
    #allocation4 [shape = 's32[2]{0}', space=sflag, size = 0x8, scoped, tag = 'scoped memory for tpu_custom_call.1']
    #allocation5 [shape = 'u8[4096]{0}', space=vmem, size = 0x1000, scoped, tag = 'input window, operand 1, single buffered']
    #allocation6 [shape = 's32[1]{0}', space=sflag, size = 0x4, scoped, tag = 'scoped memory for tpu_custom_call.1']
    #allocation7 [shape = 'u8[8192]{0}', space=vmem, size = 0x2000, scoped, tag = 'input window, operand 2']
    #allocation8 [shape = 'u8[8192]{0}', space=vmem, size = 0x2000, scoped, tag = 'input window, operand 3']
    #allocation9 [shape = 'u8[8192]{0}', space=vmem, size = 0x2000, scoped, tag = 'output window, operand 0']
    %11 = vsyncpa [#allocation3], 0
    %s12 = scalar_lea.sflag [#allocation3], 1
    %13 = vsyncpa %s12, 0
    %14 = vsyncpa [#allocation6], 0
    %15 = vsyncpa [#allocation4], 0
    %s16 = scalar_lea.sflag [#allocation4], 1
    %17 = vsyncpa %s16, 0
    loop: start=0, step=1, limit=4
    $region2: #{tpu_custom_call.1} parent=1 // loop_pre_header
      _
    $region3: #{tpu_custom_call.1} parent=1 // loop_header
      %s19 = sphi 0, %s23
      %p20 = scmp.ge.s32.totalorder %s19, 4
      %s26 = sphi 0, %s38
      %s27 = sphi 0, %s34
      %s28 = sphi 0, %s26
      %s29 = sphi 0, %s27
      %s30 = sphi 0, %s28
      %s31 = sphi 0, %s29
      %s43 = sphi 0, %s45
      %s46 = sphi 0, %s43
      %s47 = sphi 0, %s46
      %s63 = sphi 0, %s47
      %s69 = sphi 0, %s71
      %s72 = sphi 0, %s69
      %s73 = sphi 0, %s72
      %s89 = sphi 0, %s73
      %s97 = sphi 0, %s99
      %s100 = sphi 0, %s97
      %s101 = sphi 0, %s100
      %s117 = sphi 0, %s101
      %s125 = sphi 0, %s127
      %s128 = sphi 0, %s125
      %s129 = sphi 0, %s128
      %s145 = sphi 0, %s129
      %s149 = sphi 0, %s149
      %s151 = sphi 0, %s149
      %s152 = sphi 0, %s151
      %s166 = sphi 0, %s152
      %s170 = sphi 0, %s170
      %s172 = sphi 0, %s170
      %s173 = sphi 0, %s172
      %s187 = sphi 0, %s173
      %s195 = sphi 0, %s197
      %s198 = sphi 0, %s195
      %s199 = sphi 0, %s198
      %s215 = sphi 0, %s199
    $region4: #{tpu_custom_call.1} parent=1 // loop_header_branch
      %22 = sbr.rel (%p20) target = $region8
    $region5: #{tpu_custom_call.1} parent=1 // loop_body
      %s24 = ssub.s32 %s19, 1
      %s25 = ssub.s32 %s19, 2
      %s32 = sadd.s32 1, %s27
      %p33 = scmp.ge.s32.totalorder %s32, 1
      %s34 = scalar_select %p33, 0, %s32
      %s35 = sadd.s32 1, %s26
      %s36 = scalar_select %p33, %s35, %s26
      %p37 = scmp.ge.s32.totalorder %s36, 2
      %s38 = scalar_select %p37, 0, %s36
      %s39 = ssub.s32 %s26, %s38
      %s40 = ssub.s32 %s27, %s34
      %s41 = sor.u32 %s39, %s40
      %p42 = scmp.eq.s32.totalorder %s41, 0
      %s44 = sadd.s32 %s43, 1
      %s45 = scalar_select %p42, %s43, %s44
      %p48 = pneg %p42
      %p49 = scmp.eq.s32.totalorder %s19, 1
      %p50 = por %p48, %p49
      %p51 = scmp.ne.s32.totalorder %s43, %s46
      %p52 = scmp.eq.s32.totalorder %s19, 0
      %p53 = por %p51, %p52
      %p54 = scmp.ne.s32.totalorder %s43, %s46
      %p55 = scmp.eq.s32.totalorder %s24, 1
      %p56 = por %p54, %p55
      %p57 = scmp.ne.s32.totalorder %s46, %s47
      %p58 = scmp.eq.s32.totalorder %s24, 0
      %p59 = por %p57, %p58
      %p60 = scmp.ne.s32.totalorder %s46, %s47
      %p61 = scmp.eq.s32.totalorder %s25, 1
      %p62 = por %p60, %p61
      %p64 = scmp.ne.s32.totalorder %s47, %s63
      %p65 = scmp.eq.s32.totalorder %s25, 0
      %p66 = por %p64, %p65
      %s67 = ssub.s32 %s27, %s34
      %p68 = scmp.eq.s32.totalorder %s67, 0
      %s70 = sadd.s32 %s69, 1
      %s71 = scalar_select %p68, %s69, %s70
      %p74 = pneg %p68
      %p75 = scmp.eq.s32.totalorder %s19, 1
      %p76 = por %p74, %p75
      %p77 = scmp.ne.s32.totalorder %s69, %s72
      %p78 = scmp.eq.s32.totalorder %s19, 0
      %p79 = por %p77, %p78
      %p80 = scmp.ne.s32.totalorder %s69, %s72
      %p81 = scmp.eq.s32.totalorder %s24, 1
      %p82 = por %p80, %p81
      %p83 = scmp.ne.s32.totalorder %s72, %s73
      %p84 = scmp.eq.s32.totalorder %s24, 0
      %p85 = por %p83, %p84
      %p86 = scmp.ne.s32.totalorder %s72, %s73
      %p87 = scmp.eq.s32.totalorder %s25, 1
      %p88 = por %p86, %p87
      %p90 = scmp.ne.s32.totalorder %s73, %s89
      %p91 = scmp.eq.s32.totalorder %s25, 0
      %p92 = por %p90, %p91
      %s93 = ssub.s32 %s26, %s38
      %s94 = ssub.s32 %s27, %s34
      %s95 = sor.u32 %s93, %s94
      %p96 = scmp.eq.s32.totalorder %s95, 0
      %s98 = sadd.s32 %s97, 1
      %s99 = scalar_select %p96, %s97, %s98
      %p102 = pneg %p96
      %p103 = scmp.eq.s32.totalorder %s19, 1
      %p104 = por %p102, %p103
      %p105 = scmp.ne.s32.totalorder %s97, %s100
      %p106 = scmp.eq.s32.totalorder %s19, 0
      %p107 = por %p105, %p106
      %p108 = scmp.ne.s32.totalorder %s97, %s100
      %p109 = scmp.eq.s32.totalorder %s24, 1
      %p110 = por %p108, %p109
      %p111 = scmp.ne.s32.totalorder %s100, %s101
      %p112 = scmp.eq.s32.totalorder %s24, 0
      %p113 = por %p111, %p112
      %p114 = scmp.ne.s32.totalorder %s100, %s101
      %p115 = scmp.eq.s32.totalorder %s25, 1
      %p116 = por %p114, %p115
      %p118 = scmp.ne.s32.totalorder %s101, %s117
      %p119 = scmp.eq.s32.totalorder %s25, 0
      %p120 = por %p118, %p119
      %s121 = ssub.s32 %s26, %s38
      %s122 = ssub.s32 %s27, %s34
      %s123 = sor.u32 %s121, %s122
      %p124 = scmp.eq.s32.totalorder %s123, 0
      %s126 = sadd.s32 %s125, 1
      %s127 = scalar_select %p124, %s125, %s126
      %p130 = pneg %p124
      %p131 = scmp.eq.s32.totalorder %s19, 1
      %p132 = por %p130, %p131
      %p133 = scmp.ne.s32.totalorder %s125, %s128
      %p134 = scmp.eq.s32.totalorder %s19, 0
      %p135 = por %p133, %p134
      %p136 = scmp.ne.s32.totalorder %s125, %s128
      %p137 = scmp.eq.s32.totalorder %s24, 1
      %p138 = por %p136, %p137
      %p139 = scmp.ne.s32.totalorder %s128, %s129
      %p140 = scmp.eq.s32.totalorder %s24, 0
      %p141 = por %p139, %p140
      %p142 = scmp.ne.s32.totalorder %s128, %s129
      %p143 = scmp.eq.s32.totalorder %s25, 1
      %p144 = por %p142, %p143
      %p146 = scmp.ne.s32.totalorder %s129, %s145
      %p147 = scmp.eq.s32.totalorder %s25, 0
      %p148 = por %p146, %p147
      %s150 = sadd.s32 %s149, 1
      %p153 = scmp.eq.s32.totalorder %s19, 1
      %p154 = scmp.ne.s32.totalorder %s149, %s151
      %p155 = scmp.eq.s32.totalorder %s19, 0
      %p156 = por %p154, %p155
      %p157 = scmp.ne.s32.totalorder %s149, %s151
      %p158 = scmp.eq.s32.totalorder %s24, 1
      %p159 = por %p157, %p158
      %p160 = scmp.ne.s32.totalorder %s151, %s152
      %p161 = scmp.eq.s32.totalorder %s24, 0
      %p162 = por %p160, %p161
      %p163 = scmp.ne.s32.totalorder %s151, %s152
      %p164 = scmp.eq.s32.totalorder %s25, 1
      %p165 = por %p163, %p164
      %p167 = scmp.ne.s32.totalorder %s152, %s166
      %p168 = scmp.eq.s32.totalorder %s25, 0
      %p169 = por %p167, %p168
      %s171 = sadd.s32 %s170, 1
      %p174 = scmp.eq.s32.totalorder %s19, 1
      %p175 = scmp.ne.s32.totalorder %s170, %s172
      %p176 = scmp.eq.s32.totalorder %s19, 0
      %p177 = por %p175, %p176
      %p178 = scmp.ne.s32.totalorder %s170, %s172
      %p179 = scmp.eq.s32.totalorder %s24, 1
      %p180 = por %p178, %p179
      %p181 = scmp.ne.s32.totalorder %s172, %s173
      %p182 = scmp.eq.s32.totalorder %s24, 0
      %p183 = por %p181, %p182
      %p184 = scmp.ne.s32.totalorder %s172, %s173
      %p185 = scmp.eq.s32.totalorder %s25, 1
      %p186 = por %p184, %p185
      %p188 = scmp.ne.s32.totalorder %s173, %s187
      %p189 = scmp.eq.s32.totalorder %s25, 0
      %p190 = por %p188, %p189
      %s191 = ssub.s32 %s26, %s38
      %s192 = ssub.s32 %s27, %s34
      %s193 = sor.u32 %s191, %s192
      %p194 = scmp.eq.s32.totalorder %s193, 0
      %s196 = sadd.s32 %s195, 1
      %s197 = scalar_select %p194, %s195, %s196
      %p200 = pneg %p194
      %p201 = scmp.eq.s32.totalorder %s19, 1
      %p202 = por %p200, %p201
      %p203 = scmp.ne.s32.totalorder %s195, %s198
      %p204 = scmp.eq.s32.totalorder %s19, 0
      %p205 = por %p203, %p204
      %p206 = scmp.ne.s32.totalorder %s195, %s198
      %p207 = scmp.eq.s32.totalorder %s24, 1
      %p208 = por %p206, %p207
      %p209 = scmp.ne.s32.totalorder %s198, %s199
      %p210 = scmp.eq.s32.totalorder %s24, 0
      %p211 = por %p209, %p210
      %p212 = scmp.ne.s32.totalorder %s198, %s199
      %p213 = scmp.eq.s32.totalorder %s25, 1
      %p214 = por %p212, %p213
      %p216 = scmp.ne.s32.totalorder %s199, %s215
      %p217 = scmp.eq.s32.totalorder %s25, 0
      %p218 = por %p216, %p217
      %p219 = scmp.le.s32.totalorder 1, %s19
      %p220 = scmp.lt.s32.totalorder %s19, 3
      %p221 = pnand %p219, %p220
      %p222 = pneg %p221
      // Predicated region
      $region9: #{tpu_custom_call.1} parent=5 // pred_check
        _
      $region10: #{tpu_custom_call.1} parent=5 // pred_check_branch
        %224 = sbr.rel (%p221) target = $region12
      $region11: #{tpu_custom_call.1} parent=5 // pred_region
        %s225 = ssub.s32 %s19, 1
        // Predicated region
        $region13: #{tpu_custom_call.1} parent=11 // pred_check
          %p226 = pneg %p85
        $region14: #{tpu_custom_call.1} parent=11 // pred_check_branch
          %228 = sbr.rel (%p226) target = $region16
        $region15: #{tpu_custom_call.1} parent=11 // pred_region
          %s229 = smul.u32 2, %s29
          %231 = vsyncadd [#allocation6], 0
          %s232 = smul.addr %s229, 4
          %s233 = scalar_lea.hbm %s1, %s232
          %s234 = sshll.u32 %s233, 4
          %s235 = int_to_ptr.hbm [resolvable:$true] %s234
          %s236 = sshll.u32 [#allocation5], 4
          %s237 = int_to_ptr.vmem [resolvable:$true] %s236
          %242 = dma.hbm_to_vmem [thread:$0]  %s235, 128, %s237, [#allocation6], 64, 64, 4
        $region16: #{tpu_custom_call.1} parent=11 // pred_fallthru
          _
        // Predicated region
        $region17: #{tpu_custom_call.1} parent=11 // pred_check
          %p243 = pneg %p162
        $region18: #{tpu_custom_call.1} parent=11 // pred_check_branch
          %245 = sbr.rel (%p243) target = $region20
        $region19: #{tpu_custom_call.1} parent=11 // pred_region
          _
        $region20: #{tpu_custom_call.1} parent=11 // pred_fallthru
          _
        // Predicated region
        $region21: #{tpu_custom_call.1} parent=11 // pred_check
          %p246 = pneg %p183
        $region22: #{tpu_custom_call.1} parent=11 // pred_check_branch
          %248 = sbr.rel (%p246) target = $region24
        $region23: #{tpu_custom_call.1} parent=11 // pred_region
          _
        $region24: #{tpu_custom_call.1} parent=11 // pred_fallthru
          _
      $region12: #{tpu_custom_call.1} parent=5 // pred_fallthru
        _
      %p249 = scmp.lt.s32.totalorder %s19, 2
      // Predicated region
      $region25: #{tpu_custom_call.1} parent=5 // pred_check
        %p250 = pneg %p249
      $region26: #{tpu_custom_call.1} parent=5 // pred_check_branch
        %252 = sbr.rel (%p250) target = $region28
      $region27: #{tpu_custom_call.1} parent=5 // pred_region
        // Predicated region
        $region29: #{tpu_custom_call.1} parent=27 // pred_check
          %p253 = pneg %p53
        $region30: #{tpu_custom_call.1} parent=27 // pred_check_branch
          %255 = sbr.rel (%p253) target = $region32
        $region31: #{tpu_custom_call.1} parent=27 // pred_region
          %s256 = sand.u32 %s19, 1
          %s257 = scalar_lea.sflag [#allocation3], %s256
          %s258 = sand.u32 %s43, 1
          %s259 = smul.addr %s258, 8
          %s260 = scalar_lea.vmem [#allocation2], %s259
          %s261 = smul.u32 2, %s27
          %263 = vsyncadd %s257, 0
          %s264 = smul.addr %s26, 2
          %s265 = sadd.s32 %s261, %s264
          %s266 = smul.addr %s265, 4
          %s267 = scalar_lea.hbm %s0, %s266
          %s268 = sshll.u32 %s267, 4
          %s269 = int_to_ptr.hbm [resolvable:$true] %s268
          %s270 = sshll.u32 %s260, 4
          %s271 = int_to_ptr.vmem [resolvable:$true] %s270
          %276 = dma.hbm_to_vmem [thread:$0]  %s269, 128, %s271, %s257, 64, 64, 4
        $region32: #{tpu_custom_call.1} parent=27 // pred_fallthru
          _
        // Predicated region
        $region33: #{tpu_custom_call.1} parent=27 // pred_check
          %p277 = pneg %p107
        $region34: #{tpu_custom_call.1} parent=27 // pred_check_branch
          %279 = sbr.rel (%p277) target = $region36
        $region35: #{tpu_custom_call.1} parent=27 // pred_region
          %s280 = sand.u32 %s19, 1
          %s281 = scalar_lea.sflag [#allocation3], %s280
          %s282 = sand.u32 %s97, 1
          %s283 = smul.addr %s282, 8
          %s284 = scalar_lea.vmem [#allocation7], %s283
          %s285 = smul.u32 2, %s27
          %287 = vsyncadd %s281, 0
          %s288 = smul.addr %s26, 2
          %s289 = sadd.s32 %s285, %s288
          %s290 = smul.addr %s289, 4
          %s291 = scalar_lea.hbm %s2, %s290
          %s292 = sshll.u32 %s291, 4
          %s293 = int_to_ptr.hbm [resolvable:$true] %s292
          %s294 = sshll.u32 %s284, 4
          %s295 = int_to_ptr.vmem [resolvable:$true] %s294
          %300 = dma.hbm_to_vmem [thread:$0]  %s293, 128, %s295, %s281, 64, 64, 4
        $region36: #{tpu_custom_call.1} parent=27 // pred_fallthru
          _
        // Predicated region
        $region37: #{tpu_custom_call.1} parent=27 // pred_check
          %p301 = pneg %p135
        $region38: #{tpu_custom_call.1} parent=27 // pred_check_branch
          %303 = sbr.rel (%p301) target = $region40
        $region39: #{tpu_custom_call.1} parent=27 // pred_region
          %s304 = sand.u32 %s19, 1
          %s305 = scalar_lea.sflag [#allocation3], %s304
          %s306 = sand.u32 %s125, 1
          %s307 = smul.addr %s306, 8
          %s308 = scalar_lea.vmem [#allocation8], %s307
          %s309 = smul.u32 2, %s27
          %311 = vsyncadd %s305, 0
          %s312 = smul.addr %s26, 2
          %s313 = sadd.s32 %s309, %s312
          %s314 = smul.addr %s313, 4
          %s315 = scalar_lea.hbm %s3, %s314
          %s316 = sshll.u32 %s315, 4
          %s317 = int_to_ptr.hbm [resolvable:$true] %s316
          %s318 = sshll.u32 %s308, 4
          %s319 = int_to_ptr.vmem [resolvable:$true] %s318
          %324 = dma.hbm_to_vmem [thread:$0]  %s317, 128, %s319, %s305, 64, 64, 4
        $region40: #{tpu_custom_call.1} parent=27 // pred_fallthru
          _
      $region28: #{tpu_custom_call.1} parent=5 // pred_fallthru
        _
      %p325 = scmp.le.s32.totalorder 1, %s19
      %p326 = scmp.lt.s32.totalorder %s19, 3
      %p327 = pnand %p325, %p326
      %p328 = pneg %p327
      // Predicated region
      $region41: #{tpu_custom_call.1} parent=5 // pred_check
        _
      $region42: #{tpu_custom_call.1} parent=5 // pred_check_branch
        %330 = sbr.rel (%p327) target = $region44
      $region43: #{tpu_custom_call.1} parent=5 // pred_region
        %s331 = ssub.s32 %s19, 1
        %s332 = sand.u32 %s24, 1
        %s333 = scalar_lea.sflag [#allocation3], %s332
        %s334 = sand.u32 %s46, 1
        %s335 = smul.addr %s334, 8
        %s336 = scalar_lea.vmem [#allocation2], %s335
        // Predicated region
        $region45: #{tpu_custom_call.1} parent=43 // pred_check
          %p337 = pneg %p59
        $region46: #{tpu_custom_call.1} parent=43 // pred_check_branch
          %339 = sbr.rel (%p337) target = $region48
        $region47: #{tpu_custom_call.1} parent=43 // pred_region
          %341 = dma.done %s333, 128
        $region48: #{tpu_custom_call.1} parent=43 // pred_fallthru
          _
        // Predicated region
        $region49: #{tpu_custom_call.1} parent=43 // pred_check
          %p342 = pneg %p85
        $region50: #{tpu_custom_call.1} parent=43 // pred_check_branch
          %344 = sbr.rel (%p342) target = $region52
        $region51: #{tpu_custom_call.1} parent=43 // pred_region
          %346 = dma.done [#allocation6], 128
        $region52: #{tpu_custom_call.1} parent=43 // pred_fallthru
          _
        %s347 = sand.u32 %s24, 1
        %s348 = scalar_lea.sflag [#allocation3], %s347
        %s349 = sand.u32 %s100, 1
        %s350 = smul.addr %s349, 8
        %s351 = scalar_lea.vmem [#allocation7], %s350
        // Predicated region
        $region53: #{tpu_custom_call.1} parent=43 // pred_check
          %p352 = pneg %p113
        $region54: #{tpu_custom_call.1} parent=43 // pred_check_branch
          %354 = sbr.rel (%p352) target = $region56
        $region55: #{tpu_custom_call.1} parent=43 // pred_region
          %356 = dma.done %s348, 128
        $region56: #{tpu_custom_call.1} parent=43 // pred_fallthru
          _
        %s357 = sand.u32 %s24, 1
        %s358 = scalar_lea.sflag [#allocation3], %s357
        %s359 = sand.u32 %s128, 1
        %s360 = smul.addr %s359, 8
        %s361 = scalar_lea.vmem [#allocation8], %s360
        // Predicated region
        $region57: #{tpu_custom_call.1} parent=43 // pred_check
          %p362 = pneg %p141
        $region58: #{tpu_custom_call.1} parent=43 // pred_check_branch
          %364 = sbr.rel (%p362) target = $region60
        $region59: #{tpu_custom_call.1} parent=43 // pred_region
          %366 = dma.done %s358, 128
        $region60: #{tpu_custom_call.1} parent=43 // pred_fallthru
          _
        %s367 = sand.u32 %s24, 1
        %s368 = scalar_lea.sflag [#allocation3], %s367
        %s369 = sand.u32 %s46, 1
        %s370 = smul.addr %s369, 8
        %s371 = scalar_lea.vmem [#allocation2], %s370
        %p372 = pneg %p59
        %p373 = pneg %p56
        %p374 = pneg %p85
        %p375 = pneg %p82
        %s376 = sand.u32 %s24, 1
        %s377 = scalar_lea.sflag [#allocation3], %s376
        %s378 = sand.u32 %s100, 1
        %s379 = smul.addr %s378, 8
        %s380 = scalar_lea.vmem [#allocation7], %s379
        %p381 = pneg %p113
        %p382 = pneg %p110
        %s383 = sand.u32 %s24, 1
        %s384 = scalar_lea.sflag [#allocation3], %s383
        %s385 = sand.u32 %s128, 1
        %s386 = smul.addr %s385, 8
        %s387 = scalar_lea.vmem [#allocation8], %s386
        %p388 = pneg %p141
        %p389 = pneg %p138
        %p390 = pneg %p162
        %p391 = pneg %p159
        %p392 = pneg %p183
        %p393 = pneg %p180
        %p394 = pneg %p211
        %p395 = pneg %p208
        %s396 = sand.u32 %s198, 1
        %s397 = scalar_lea.sflag [#allocation4], %s396
        %s398 = sand.u32 %s198, 1
        %s399 = smul.addr %s398, 8
        %s400 = scalar_lea.vmem [#allocation9], %s399
        %s401 = smul.u32 2, %s29
        %s402 = smul.u32 2, %s29
        %s403 = smul.u32 2, %s29
        %s404 = smul.u32 2, %s29
        %s405 = smul.u32 2, %s29
        %v406 = vld [vmem:[%s4] sm:$0x1]
        %v407 = vld [vmem:[%s5] sm:$0x1]
        %v408 = vld [vmem:[#allocation5] sm:$0xf]
        %v409 = vld [vmem:[#allocation5 + $0x4] sm:$0xf]
        %v410 = vunpack.c.l.bf16 %v408
        %v411 = vunpack.c.l.bf16 %v409
        %v412 = vld [vmem:[%s336] sm:$0xf]
        %v413 = vld [vmem:[%s336 + $0x4] sm:$0xf]
        %v414 = vunpack.c.l.bf16 %v412
        %v415 = vunpack.c.l.bf16 %v413
        %v416 = vadd.f32 %v414, %v410
        %v417 = vadd.f32 %v415, %v411
        %vm418 = vcmask 523264
        %v419 = vsel %vm418, %v416, 0.0
        %420 = vadd.xlane.f32.xlu0 %v419
        %v421 = vpop.xlane.xlu0 %420
        %v422 = vsel %vm418, %v417, 0.0
        %423 = vadd.xlane.f32.xlu0 %v422
        %v424 = vpop.xlane.xlu0 %423
        %v425 = vrcp.pop 64.0
        %v426 = vmul.f32 64.0, %v425
        %v427 = vsub.f32 1.0, %v426
        %v428 = vmul.f32 %v425, %v427
        %v429 = vadd.f32 %v425, %v428
        %vm430 = vweird.f32 %v425
        %v431 = vsel %vm430, %v425, %v429
        %v432 = vmul.f32 %v421, %v431
        %v433 = vmul.f32 %v424, %v431
        %v434 = vsub.f32 %v416, %v432
        %v435 = vsub.f32 %v417, %v433
        %v436 = vmul.f32 %v434, %v434
        %v437 = vmul.f32 %v435, %v435
        %v438 = vsel %vm418, %v436, 0.0
        %439 = vadd.xlane.f32.xlu0 %v438
        %v440 = vpop.xlane.xlu0 %439
        %v441 = vsel %vm418, %v437, 0.0
        %442 = vadd.xlane.f32.xlu0 %v441
        %v443 = vpop.xlane.xlu0 %442
        %v444 = vmul.f32 %v440, %v431
        %v445 = vmul.f32 %v443, %v431
        %v446 = vadd.f32 %v444, 1e-12
        %v447 = vadd.f32 %v445, 1e-12
        %v448 = vrsqrt.pop %v446
        %v449 = vmul.f32 %v448, %v446
        %v450 = vmul.f32 %v449, %v448
        %v451 = vmul.f32 0.5, %v450
        %v452 = vsub.f32 1.5, %v451
        %v453 = vmul.f32 %v448, %v452
        %vm454 = vweird.f32 %v446
        %vm455 = vweird.f32 %v448
        %vm456 = vmor %vm454, %vm455
        %v457 = vsel %vm456, %v448, %v453
        %v458 = vrsqrt.pop %v447
        %v459 = vmul.f32 %v458, %v447
        %v460 = vmul.f32 %v459, %v458
        %v461 = vmul.f32 0.5, %v460
        %v462 = vsub.f32 1.5, %v461
        %v463 = vmul.f32 %v458, %v462
        %vm464 = vweird.f32 %v447
        %vm465 = vweird.f32 %v458
        %vm466 = vmor %vm464, %vm465
        %v467 = vsel %vm466, %v458, %v463
        %v468 = vmul.f32 %v434, %v457
        %v469 = vmul.f32 %v435, %v467
        %v471 = vperm.slane %v406, 0
        %v473 = vmul.f32 %v468, %v471
        %v474 = vmul.f32 %v469, %v471
        %v476 = vperm.slane %v407, 0
        %v478 = vadd.f32 %v473, %v476
        %v479 = vadd.f32 %v474, %v476
        %v480 = vld [vmem:[%s351] sm:$0xf]
        %v481 = vld [vmem:[%s351 + $0x4] sm:$0xf]
        %v482 = vunpack.c.l.bf16 %v480
        %v483 = vunpack.c.l.bf16 %v481
        %v484 = vadd.f32 %v478, %v482
        %v485 = vadd.f32 %v479, %v483
        %v486 = vld [vmem:[%s361] sm:$0xf]
        %v487 = vld [vmem:[%s361 + $0x4] sm:$0xf]
        %v488 = vunpack.c.l.bf16 %v486
        %v489 = vunpack.c.l.bf16 %v487
        %v490 = vadd.f32 %v484, %v488
        %v491 = vadd.f32 %v485, %v489
        %v492 = vadd.f32 %v490, %v410
        %v493 = vadd.f32 %v491, %v411
        %v494 = vsel %vm418, %v492, 0.0
        %495 = vadd.xlane.f32.xlu0 %v494
        %v496 = vpop.xlane.xlu0 %495
        %v497 = vsel %vm418, %v493, 0.0
        %498 = vadd.xlane.f32.xlu0 %v497
        %v499 = vpop.xlane.xlu0 %498
        %v500 = vmul.f32 %v496, %v431
        %v501 = vmul.f32 %v499, %v431
        %v502 = vsub.f32 %v492, %v500
        %v503 = vsub.f32 %v493, %v501
        %v504 = vmul.f32 %v502, %v502
        %v505 = vmul.f32 %v503, %v503
        %v506 = vsel %vm418, %v504, 0.0
        %507 = vadd.xlane.f32.xlu0 %v506
        %v508 = vpop.xlane.xlu0 %507
        %v509 = vsel %vm418, %v505, 0.0
        %510 = vadd.xlane.f32.xlu0 %v509
        %v511 = vpop.xlane.xlu0 %510
        %v512 = vmul.f32 %v508, %v431
        %v513 = vmul.f32 %v511, %v431
        %v514 = vadd.f32 %v512, 1e-12
        %v515 = vadd.f32 %v513, 1e-12
        %v516 = vrsqrt.pop %v514
        %v517 = vmul.f32 %v516, %v514
        %v518 = vmul.f32 %v517, %v516
        %v519 = vmul.f32 0.5, %v518
        %v520 = vsub.f32 1.5, %v519
        %v521 = vmul.f32 %v516, %v520
        %vm522 = vweird.f32 %v514
        %vm523 = vweird.f32 %v516
        %vm524 = vmor %vm522, %vm523
        %v525 = vsel %vm524, %v516, %v521
        %v526 = vrsqrt.pop %v515
        %v527 = vmul.f32 %v526, %v515
        %v528 = vmul.f32 %v527, %v526
        %v529 = vmul.f32 0.5, %v528
        %v530 = vsub.f32 1.5, %v529
        %v531 = vmul.f32 %v526, %v530
        %vm532 = vweird.f32 %v515
        %vm533 = vweird.f32 %v526
        %vm534 = vmor %vm532, %vm533
        %v535 = vsel %vm534, %v526, %v531
        %v536 = vmul.f32 %v502, %v525
        %v537 = vmul.f32 %v503, %v535
        %v538 = vmul.f32 %v536, %v471
        %v539 = vmul.f32 %v537, %v471
        %v540 = vadd.f32 %v538, %v476
        %v541 = vadd.f32 %v539, %v476
        %v542 = vpack.c.bf16 %v540, %v540
        %v543 = vpack.c.bf16 %v541, %v541
        %vm544 = vcmask 519168
        %545 = vst.msk [vmem:[%s400] sm:$0xf] %vm544, %v542
        %546 = vst.msk [vmem:[%s400 + $0x4] sm:$0xf] %vm544, %v543
        %s547 = sand.u32 %s198, 1
        %s548 = scalar_lea.sflag [#allocation4], %s547
        %s549 = sand.u32 %s198, 1
        %s550 = smul.addr %s549, 8
        %s551 = scalar_lea.vmem [#allocation9], %s550
        // Predicated region
        $region61: #{tpu_custom_call.1} parent=43 // pred_check
          %p552 = pneg %p208
        $region62: #{tpu_custom_call.1} parent=43 // pred_check_branch
          %554 = sbr.rel (%p552) target = $region64
        $region63: #{tpu_custom_call.1} parent=43 // pred_region
          %s555 = smul.u32 2, %s29
          %557 = vsyncadd %s548, 0
          %s558 = smul.addr %s28, 2
          %s559 = sadd.s32 %s555, %s558
          %s560 = smul.addr %s559, 4
          %s561 = scalar_lea.hbm %s6, %s560
          %s562 = sshll.u32 %s551, 4
          %s563 = int_to_ptr.vmem [resolvable:$true] %s562
          %s564 = sshll.u32 %s561, 4
          %s565 = int_to_ptr.hbm [resolvable:$true] %s564
          %570 = dma.vmem_to_hbm [thread:$0]  %s563, 128, %s565, %s548, 64, 64, 4
        $region64: #{tpu_custom_call.1} parent=43 // pred_fallthru
          _
      $region44: #{tpu_custom_call.1} parent=5 // pred_fallthru
        _
      %p571 = scmp.le.s32.totalorder 2, %s19
      // Predicated region
      $region65: #{tpu_custom_call.1} parent=5 // pred_check
        %p572 = pneg %p571
      $region66: #{tpu_custom_call.1} parent=5 // pred_check_branch
        %574 = sbr.rel (%p572) target = $region68
      $region67: #{tpu_custom_call.1} parent=5 // pred_region
        %s575 = ssub.s32 %s19, 2
        // Predicated region
        $region69: #{tpu_custom_call.1} parent=67 // pred_check
          %p576 = pneg %p214
        $region70: #{tpu_custom_call.1} parent=67 // pred_check_branch
          %578 = sbr.rel (%p576) target = $region72
        $region71: #{tpu_custom_call.1} parent=67 // pred_region
          %s579 = sand.u32 %s199, 1
          %s580 = scalar_lea.sflag [#allocation4], %s579
          %s581 = sand.u32 %s199, 1
          %s582 = smul.addr %s581, 8
          %s583 = scalar_lea.vmem [#allocation9], %s582
          %585 = dma.done %s580, 128
        $region72: #{tpu_custom_call.1} parent=67 // pred_fallthru
          _
      $region68: #{tpu_custom_call.1} parent=5 // pred_fallthru
        _
    $region6: #{tpu_custom_call.1} parent=1 // loop_footer
      %s23 = sadd.s32 1, %s19
    $region7: #{tpu_custom_call.1} parent=1 // loop_footer_branch
      %18 = sbr.rel target = $region3
    $region8: #{tpu_custom_call.1} parent=1 // loop_exit
      _
    %586 = vsyncpa [#allocation3], 1
    %s587 = scalar_lea.sflag [#allocation3], 1
    %588 = vsyncpa %s587, 1
    %589 = vsyncpa [#allocation6], 1
    %590 = vsyncpa [#allocation4], 1
    %s591 = scalar_lea.sflag [#allocation4], 1
    %592 = vsyncpa %s591, 1

</llo_original>
